<compile_context>
chip_gen: v7x
topology: tpu7x:2x2x1
jax: 0.10.0
libtpu: 0.0.40
codegen_flags: <defaults>
</compile_context>

<pallas_src>
import functools
import math

import jax
import jax.numpy as jnp
from jax import lax
from jax.experimental import pallas as pl
from jax.experimental.pallas import tpu as pltpu


# ---------------------------------------------------------------------------
# Tiling helpers
# ---------------------------------------------------------------------------
_MAX_TILE_ROWS_STATS = 1024    # >= ~85% of HBM roofline; bounds unroll/VMEM
_MAX_TILE_ROWS_APPLY = 2048


def _round_up(x: int, m: int) -> int:
    return ((x + m - 1) // m) * m


def _sublane_multiple(dtype) -> int:
    # f32 -> 8, bf16/f16 -> 16, int8/fp8 -> 32
    return max(8, 32 // jnp.dtype(dtype).itemsize)


@functools.lru_cache(maxsize=None)
def _vmem_config():
    """(streaming budget bytes, scoped vmem_limit_bytes) for this chip."""
    cap = None
    try:
        info = pltpu.get_tpu_info()
        cap = getattr(info, "vmem_capacity_bytes", None)
    except Exception:
        cap = None
    if cap is not None and cap >= 100 * 1024 * 1024:
        # v5e / v6e: 128 MiB physical VMEM -> bigger tiles for wide D.
        return 48 * 1024 * 1024, 96 * 1024 * 1024
    # v7x (64 MiB physical, 32 MiB scoped default) or unknown: conservative.
    return 20 * 1024 * 1024, 32 * 1024 * 1024


def _pick_tile_rows(n_rows: int, d: int, itemsize: int, stream_blocks: int,
                    fixed_bytes: int, mult: int, budget: int,
                    max_rows: int) -> int:
    """Largest row-tile (multiple of `mult`) whose double-buffered streaming
    blocks plus fixed allocations fit the VMEM budget.  `d` must already be
    the lane-padded width."""
    lane_d = _round_up(d, 128)
    per_row = max(1, stream_blocks * 2 * lane_d * itemsize)   # 2x dbl-buffered
    avail = max(budget - fixed_bytes, per_row * mult)
    t = avail // per_row
    t = (t // mult) * mult
    t = min(t, max_rows, _round_up(n_rows, mult))
    return int(max(mult, t))


def _fold_factor(n_rows: int, d: int) -> int:
    """Lane-fold factor: fold rows into lanes so the last dim approaches a
    multiple of 128.  Partial fold (gcd) when the ideal factor doesn't divide
    the row count."""
    if d % 128 == 0 or n_rows <= 1:
        return 1
    k0 = 128 // math.gcd(d, 128)
    return max(1, math.gcd(n_rows, k0))


# ---------------------------------------------------------------------------
# Kernel 1: per-feature min/max reduction over rows
# ---------------------------------------------------------------------------
def _accumulate_minmax(x_ref, min_sc, max_sc, *, n_chunks, mult, d, acc_dtype,
                       masked, row_offset, n_rows):
    """Elementwise (VPU) min/max accumulation of one row-tile into the
    (mult, d) scratch, chunked by the sublane multiple."""
    if masked:
        # Hoisted once per tile; reused by every chunk.
        base_rid = (lax.broadcasted_iota(jnp.int32, (mult, d), 0) + row_offset)
        pos_inf = jnp.asarray(jnp.inf, dtype=acc_dtype)
        neg_inf = jnp.asarray(-jnp.inf, dtype=acc_dtype)

    def body(k, carry):
        cur_min, cur_max = carry
        start = pl.multiple_of(k * mult, mult)
        chunk = x_ref[pl.ds(start, mult), :].astype(acc_dtype)
        if masked:
            valid = (base_rid + k * mult) < n_rows
            cmin = jnp.where(valid, chunk, pos_inf)
            cmax = jnp.where(valid, chunk, neg_inf)
        else:
            cmin = chunk
            cmax = chunk
        return jnp.minimum(cur_min, cmin), jnp.maximum(cur_max, cmax)

    cur_min, cur_max = lax.fori_loop(
        0, n_chunks, body, (min_sc[...], max_sc[...]),
        unroll=min(8, n_chunks))
    min_sc[...] = cur_min
    max_sc[...] = cur_max


def _make_stats_kernel(n_rows: int, tile_rows: int, d: int, mult: int,
                       acc_dtype):
    n_chunks = tile_rows // mult
    ragged = (n_rows % tile_rows) != 0

    def kernel(x_ref, min_ref, max_ref, min_sc, max_sc):
        i = pl.program_id(0)
        last = pl.num_programs(0) - 1

        @pl.when(i == 0)
        def _():
            min_sc[...] = jnp.full(min_sc.shape, jnp.inf, min_sc.dtype)
            max_sc[...] = jnp.full(max_sc.shape, -jnp.inf, max_sc.dtype)

        def make_acc(masked):
            def run():
                _accumulate_minmax(
                    x_ref, min_sc, max_sc, n_chunks=n_chunks, mult=mult, d=d,
                    acc_dtype=acc_dtype, masked=masked,
                    row_offset=i * tile_rows, n_rows=n_rows)
            return run

        if ragged:
            # Steady state: unmasked.  Only the last (partial) tile pays the
            # iota/compare/select masking cost.
            pl.when(i < last)(make_acc(False))
            pl.when(i == last)(make_acc(True))
        else:
            make_acc(False)()

        @pl.when(i == last)
        def _():
            # Single cross-sublane (XLU) reduce, done once.
            min_ref[...] = jnp.min(min_sc[...].astype(jnp.float32), axis=0,
                                   keepdims=True)
            max_ref[...] = jnp.max(max_sc[...].astype(jnp.float32), axis=0,
                                   keepdims=True)

    return kernel


def compute_scale_offset(inputs: jax.Array, tile_rows: int | None = None):
    """inputs: (N, D) -> (scale, offset), each (1, D) float32."""
    n, d = inputs.shape

    # Lane-fold: (N, D) -> (N/fold, fold*D) so loads/compares are lane-dense
    # when D is not a multiple of 128.  Folded per-feature copies are combined
    # in plain JAX below.
    fold = _fold_factor(n, d)
    x = inputs.reshape(n // fold, fold * d) if fold > 1 else inputs
    n_eff, d_eff = x.shape

    dtype = jnp.dtype(x.dtype)
    # min/max is exact in bf16/f16 -> accumulate natively (halves scratch,
    # 2x elems/vreg on v6e/v7x); everything else accumulates in f32.
    if dtype in (jnp.dtype(jnp.bfloat16), jnp.dtype(jnp.float16)):
        acc_dtype = x.dtype
    else:
        acc_dtype = jnp.float32
    mult = _sublane_multiple(dtype)
    itemsize = dtype.itemsize
    budget, limit = _vmem_config()

    lane_d = _round_up(d_eff, 128)
    fixed = (2 * mult * lane_d * jnp.dtype(acc_dtype).itemsize   # scratch
             + 2 * 2 * lane_d * 4)                               # out blocks
    if tile_rows is None:
        tile_rows = _pick_tile_rows(n_eff, d_eff, itemsize, stream_blocks=1,
                                    fixed_bytes=fixed, mult=mult,
                                    budget=budget,
                                    max_rows=_MAX_TILE_ROWS_STATS)
    else:
        tile_rows = max(mult, _round_up(int(tile_rows), mult))

    grid = (pl.cdiv(n_eff, tile_rows),)
    kernel = _make_stats_kernel(n_eff, tile_rows, d_eff, mult, acc_dtype)

    cost = pl.CostEstimate(
        flops=2 * n_eff * d_eff,
        transcendentals=0,
        bytes_accessed=n_eff * d_eff * itemsize + 2 * d_eff * 4)

    xmin, xmax = pl.pallas_call(
        kernel,
        out_shape=(
            jax.ShapeDtypeStruct((1, d_eff), jnp.float32),
            jax.ShapeDtypeStruct((1, d_eff), jnp.float32),
        ),
        grid_spec=pltpu.PrefetchScalarGridSpec(
            num_scalar_prefetch=0,
            grid=grid,
            in_specs=[pl.BlockSpec((tile_rows, d_eff), lambda i: (i, 0))],
            out_specs=[
                pl.BlockSpec((1, d_eff), lambda i: (0, 0)),
                pl.BlockSpec((1, d_eff), lambda i: (0, 0)),
            ],
            scratch_shapes=[
                pltpu.VMEM((mult, d_eff), acc_dtype),   # min accumulator
                pltpu.VMEM((mult, d_eff), acc_dtype),   # max accumulator
            ],
        ),
        compiler_params=pltpu.CompilerParams(
            dimension_semantics=("arbitrary",),   # row reduction axis
            vmem_limit_bytes=limit,
        ),
        cost_estimate=cost,
    )(x)

    # Combine folded copies + scale/offset math in plain JAX (negligible size,
    # always float32 regardless of input dtype).
    if fold > 1:
        xmin = jnp.min(xmin.reshape(fold, d), axis=0)
        xmax = jnp.max(xmax.reshape(fold, d), axis=0)
    else:
        xmin = xmin.reshape(d)
        xmax = xmax.reshape(d)

    delta = xmax - xmin
    # torch.isclose(delta, 0.0) with default rtol=1e-5, atol=1e-8 and b==0
    # reduces to |delta| <= 1e-8.
    zeros = jnp.abs(delta) <= 1e-8
    safe = jnp.where(zeros, 1.0, delta)
    scale = jnp.where(zeros, 1.0, 2.0 / safe)
    offset = jnp.where(zeros, 0.0, (2.0 * xmin + delta) / safe)
    return (scale.reshape(1, d).astype(jnp.float32),
            offset.reshape(1, d).astype(jnp.float32))


# ---------------------------------------------------------------------------
# Kernel 2: forward pass  out = inp * scale - offset
# ---------------------------------------------------------------------------
def _apply_kernel(x_ref, scale_ref, offset_ref, o_ref):
    x = x_ref[...].astype(jnp.float32)
    o_ref[...] = (x * scale_ref[...] - offset_ref[...]).astype(o_ref.dtype)


def apply_scaler(inp: jax.Array, scale: jax.Array, offset: jax.Array,
                 tile_rows: int | None = None):
    """inp: (B, D); scale/offset: (1, D) float32 (or (D,)).  Returns (B, D)."""
    b, d = inp.shape
    scale = scale.reshape(1, d).astype(jnp.float32)
    offset = offset.reshape(1, d).astype(jnp.float32)

    # Lane-dense layout: fold rows into lanes so output stores are full-lane
    # vst instead of masked partial stores.  Partial fold (gcd) when the ideal
    # factor doesn't divide B.  Pure wrapper-side metadata reshape.
    fold = _fold_factor(b, d)
    if fold > 1:
        x = inp.reshape(b // fold, fold * d)
        scale_f = jnp.tile(scale, (1, fold))
        offset_f = jnp.tile(offset, (1, fold))
    else:
        x, scale_f, offset_f = inp, scale, offset

    b_eff, d_eff = x.shape
    itemsize = jnp.dtype(inp.dtype).itemsize
    mult = _sublane_multiple(inp.dtype)
    budget, limit = _vmem_config()

    lane_d = _round_up(d_eff, 128)
    fixed = 2 * 2 * lane_d * 4          # scale + offset f32 blocks (dbl-buf)
    if tile_rows is None:
        tile_rows = _pick_tile_rows(b_eff, d_eff, itemsize, stream_blocks=2,
                                    fixed_bytes=fixed, mult=mult,
                                    budget=budget,
                                    max_rows=_MAX_TILE_ROWS_APPLY)
    else:
        tile_rows = max(mult, _round_up(int(tile_rows), mult))

    grid = (pl.cdiv(b_eff, tile_rows),)

    cost = pl.CostEstimate(
        flops=2 * b_eff * d_eff,
        transcendentals=0,
        bytes_accessed=2 * b_eff * d_eff * itemsize + 2 * d_eff * 4)

    out = pl.pallas_call(
        _apply_kernel,
        out_shape=jax.ShapeDtypeStruct((b_eff, d_eff), inp.dtype),
        grid_spec=pltpu.PrefetchScalarGridSpec(
            num_scalar_prefetch=0,
            grid=grid,
            in_specs=[
                pl.BlockSpec((tile_rows, d_eff), lambda i: (i, 0)),
                pl.BlockSpec((1, d_eff), lambda i: (0, 0)),
                pl.BlockSpec((1, d_eff), lambda i: (0, 0)),
            ],
            out_specs=pl.BlockSpec((tile_rows, d_eff), lambda i: (i, 0)),
        ),
        compiler_params=pltpu.CompilerParams(
            # "parallel" row axis shards across TensorCores on multi-TC chips
            # (v7x); harmless on single-TC v5e/v6e.
            dimension_semantics=("parallel",),
            vmem_limit_bytes=limit,
        ),
        cost_estimate=cost,
    )(x, scale_f, offset_f)

    if fold > 1:
        out = out.reshape(b, d)
    return out


class ComponentWiseInputScalerPallas:
    """JAX/Pallas port of milad's ComponentWiseInputScaler."""

    def __init__(self, inputs: jax.Array):
        self._scale, self._offset = compute_scale_offset(inputs)

    def __call__(self, inp: jax.Array) -> jax.Array:
        return apply_scaler(inp, self._scale, self._offset)


# ---------------------------------------------------------------------------
# Pure-JAX reference for correctness checking
# ---------------------------------------------------------------------------
def _reference(init_inputs, inp):
    xmin = jnp.min(init_inputs.astype(jnp.float32), axis=0)
    xmax = jnp.max(init_inputs.astype(jnp.float32), axis=0)
    delta = xmax - xmin
    zeros = jnp.abs(delta) <= 1e-8
    safe = jnp.where(zeros, 1.0, delta)
    scale = jnp.where(zeros, 1.0, 2.0 / safe)
    offset = jnp.where(zeros, 0.0, (2.0 * xmin + delta) / safe)
    return (inp * scale - offset).astype(inp.dtype)


if __name__ == "__main__":
    key = jax.random.PRNGKey(0)
    k1, k2, k3, k4 = jax.random.split(key, 4)

    # --- Main test: exercises the lane-fold path (D=32 -> fold 4) ----------
    N, B, D = 64, 8, 32
    init_inputs = jax.random.normal(k1, (N, D), dtype=jnp.float32) * 3.0 + 1.0
    # Constant feature to exercise the delta==0 (scale=1, offset=0) path.
    init_inputs = init_inputs.at[:, 5].set(0.7)
    x = jax.random.normal(k2, (B, D), dtype=jnp.float32)

    scaler = ComponentWiseInputScalerPallas(init_inputs)
    out = jax.block_until_ready(scaler(x))
    ref = _reference(init_inputs, x)
    assert out.shape == ref.shape and out.dtype == ref.dtype
    assert jnp.allclose(out, ref, rtol=1e-5, atol=1e-5), "mismatch (main)"

    # --- Ragged test: row counts not multiples of tile / fold factors ------
    N2, B2 = 50, 10
    init2 = jax.random.normal(k3, (N2, D), dtype=jnp.float32) * 2.0 - 0.5
    x2 = jax.random.normal(k4, (B2, D), dtype=jnp.float32)
    scaler2 = ComponentWiseInputScalerPallas(init2)
    out2 = jax.block_until_ready(scaler2(x2))
    ref2 = _reference(init2, x2)
    assert jnp.allclose(out2, ref2, rtol=1e-5, atol=1e-5), "mismatch (ragged)"

    print("KERNEL_OK")
</pallas_src>

<mosaic_0001>
module attributes {stable_mosaic.version = 11 : i64} {
  func.func @kernel(%arg0: i32, %arg1: memref<16x128xf32, #tpu.memory_space<vmem>>, %arg2: memref<1x128xf32, #tpu.memory_space<vmem>>, %arg3: memref<1x128xf32, #tpu.memory_space<vmem>>, %arg4: memref<8x128xf32, #tpu.memory_space<vmem>>, %arg5: memref<8x128xf32, #tpu.memory_space<vmem>>) attributes {dimension_semantics = [#tpu.dimension_semantics<arbitrary>], iteration_bounds = array<i64: 1>, scalar_prefetch = 0 : i64, scratch_operands = 2 : i64, tpu.core_type = #tpu.core_type<tc>, window_params = [{transform_indices = @transform_0, window_bounds = array<i64: 16, 128>}, {pipeline_mode = #tpu.pipeline_mode<synchronous>, transform_indices = @transform_1, window_bounds = array<i64: 1, 128>}, {pipeline_mode = #tpu.pipeline_mode<synchronous>, transform_indices = @transform_2, window_bounds = array<i64: 1, 128>}]} {
    %c0_i32 = arith.constant 0 : i32
    %0 = arith.cmpi eq, %arg0, %c0_i32 : i32
    %1 = arith.extui %0 : i1 to i32
    %c0_i32_0 = arith.constant 0 : i32
    %2 = arith.cmpi ne, %1, %c0_i32_0 : i32
    scf.if %2 {
      %cst = arith.constant 0x7F800000 : f32
      %22 = vector.broadcast %cst : f32 to vector<8x128xf32>
      %c0_14 = arith.constant 0 : index
      %c0_15 = arith.constant 0 : index
      %23 = vector.load %arg4[%c0_14, %c0_15] : memref<8x128xf32, #tpu.memory_space<vmem>>, vector<8x128xf32>
      tpu.vector_store %arg4[%c0_14, %c0_15], %22 {strides = array<i32>} : memref<8x128xf32, #tpu.memory_space<vmem>>, vector<8x128xf32>,
      %cst_16 = arith.constant 0xFF800000 : f32
      %24 = vector.broadcast %cst_16 : f32 to vector<8x128xf32>
      %c0_17 = arith.constant 0 : index
      %c0_18 = arith.constant 0 : index
      %25 = vector.load %arg5[%c0_17, %c0_18] : memref<8x128xf32, #tpu.memory_space<vmem>>, vector<8x128xf32>
      tpu.vector_store %arg5[%c0_17, %c0_18], %24 {strides = array<i32>} : memref<8x128xf32, #tpu.memory_space<vmem>>, vector<8x128xf32>,
    } else {
    }
    %c0 = arith.constant 0 : index
    %c0_1 = arith.constant 0 : index
    %3 = vector.load %arg4[%c0, %c0_1] : memref<8x128xf32, #tpu.memory_space<vmem>>, vector<8x128xf32>
    %c0_2 = arith.constant 0 : index
    %c0_3 = arith.constant 0 : index
    %4 = vector.load %arg5[%c0_2, %c0_3] : memref<8x128xf32, #tpu.memory_space<vmem>>, vector<8x128xf32>
    %c0_i32_4 = arith.constant 0 : i32
    %c8_i32 = arith.constant 8 : i32
    %5 = arith.muli %c0_i32_4, %c8_i32 : i32
    %6 = tpu.assume_multiple %5, 8 : i32
    %7 = arith.index_cast %6 : i32 to index
    %c0_5 = arith.constant 0 : index
    %8 = vector.load %arg1[%7, %c0_5] : memref<16x128xf32, #tpu.memory_space<vmem>>, vector<8x128xf32>
    %9 = arith.minimumf %3, %8 : vector<8x128xf32>
    %10 = arith.maximumf %4, %8 : vector<8x128xf32>
    %c1_i32 = arith.constant 1 : i32
    %c8_i32_6 = arith.constant 8 : i32
    %11 = arith.muli %c1_i32, %c8_i32_6 : i32
    %12 = tpu.assume_multiple %11, 8 : i32
    %13 = arith.index_cast %12 : i32 to index
    %c0_7 = arith.constant 0 : index
    %14 = vector.load %arg1[%13, %c0_7] : memref<16x128xf32, #tpu.memory_space<vmem>>, vector<8x128xf32>
    %15 = arith.minimumf %9, %14 : vector<8x128xf32>
    %16 = arith.maximumf %10, %14 : vector<8x128xf32>
    %c2_i32 = arith.constant 2 : i32
    %c0_8 = arith.constant 0 : index
    %c0_9 = arith.constant 0 : index
    %17 = vector.load %arg4[%c0_8, %c0_9] : memref<8x128xf32, #tpu.memory_space<vmem>>, vector<8x128xf32>
    tpu.vector_store %arg4[%c0_8, %c0_9], %15 {strides = array<i32>} : memref<8x128xf32, #tpu.memory_space<vmem>>, vector<8x128xf32>,
    %c0_10 = arith.constant 0 : index
    %c0_11 = arith.constant 0 : index
    %18 = vector.load %arg5[%c0_10, %c0_11] : memref<8x128xf32, #tpu.memory_space<vmem>>, vector<8x128xf32>
    tpu.vector_store %arg5[%c0_10, %c0_11], %16 {strides = array<i32>} : memref<8x128xf32, #tpu.memory_space<vmem>>, vector<8x128xf32>,
    %c0_i32_12 = arith.constant 0 : i32
    %19 = arith.cmpi eq, %arg0, %c0_i32_12 : i32
    %20 = arith.extui %19 : i1 to i32
    %c0_i32_13 = arith.constant 0 : i32
    %21 = arith.cmpi ne, %20, %c0_i32_13 : i32
    scf.if %21 {
      %c0_14 = arith.constant 0 : index
      %c0_15 = arith.constant 0 : index
      %22 = vector.load %arg4[%c0_14, %c0_15] : memref<8x128xf32, #tpu.memory_space<vmem>>, vector<8x128xf32>
      %cst = arith.constant dense<0x7F800000> : vector<128xf32>
      %23 = vector.multi_reduction <minimumf>, %22, %cst [0] : vector<8x128xf32> to vector<128xf32>
      %24 = vector.shape_cast %23 : vector<128xf32> to vector<1x128xf32>
      %c0_16 = arith.constant 0 : index
      %c0_17 = arith.constant 0 : index
      %25 = vector.load %arg2[%c0_16, %c0_17] : memref<1x128xf32, #tpu.memory_space<vmem>>, vector<1x128xf32>
      tpu.vector_store %arg2[%c0_16, %c0_17], %24 {strides = array<i32>} : memref<1x128xf32, #tpu.memory_space<vmem>>, vector<1x128xf32>,
      %c0_18 = arith.constant 0 : index
      %c0_19 = arith.constant 0 : index
      %26 = vector.load %arg5[%c0_18, %c0_19] : memref<8x128xf32, #tpu.memory_space<vmem>>, vector<8x128xf32>
      %cst_20 = arith.constant dense<0xFF800000> : vector<128xf32>
      %27 = vector.multi_reduction <maximumf>, %26, %cst_20 [0] : vector<8x128xf32> to vector<128xf32>
      %28 = vector.shape_cast %27 : vector<128xf32> to vector<1x128xf32>
      %c0_21 = arith.constant 0 : index
      %c0_22 = arith.constant 0 : index
      %29 = vector.load %arg3[%c0_21, %c0_22] : memref<1x128xf32, #tpu.memory_space<vmem>>, vector<1x128xf32>
      tpu.vector_store %arg3[%c0_21, %c0_22], %28 {strides = array<i32>} : memref<1x128xf32, #tpu.memory_space<vmem>>, vector<1x128xf32>,
    } else {
    }
    return
  }
  func.func @transform_0(%arg0: i32) -> (i32, i32) {
    %c0_i32 = arith.constant 0 : i32
    %c0_i32_0 = arith.constant 0 : i32
    return %arg0, %c0_i32 : i32, i32
  }
  func.func @transform_1(%arg0: i32) -> (i32, i32) {
    %c0_i32 = arith.constant 0 : i32
    %c0_i32_0 = arith.constant 0 : i32
    %c0_i32_1 = arith.constant 0 : i32
    return %c0_i32, %c0_i32_0 : i32, i32
  }
  func.func @transform_2(%arg0: i32) -> (i32, i32) {
    %c0_i32 = arith.constant 0 : i32
    %c0_i32_0 = arith.constant 0 : i32
    %c0_i32_1 = arith.constant 0 : i32
    return %c0_i32, %c0_i32_0 : i32, i32
  }
}

</mosaic_0001>

<llo_original>
// kernel: tpu_custom_call.1
$region0: #{tpu_custom_call.1}
  #allocation0 [shape = 'u32[]', space=smem, size = 0x4, offset = 0x4, fixed_abs, tag = 'smem constant byte address 0x4 - core index']
  #allocation1 [shape = 'u32[144,128]{1,0:T(1,128)}', space=vmem, size = 0x12000, scoped, tag = 'internal scratch']
  #allocation2 [shape = 'f32[8,128]{1,0:T(8,128)}', space=vmem, size = 0x1000, scoped, tag = 'scratch operand']
  #allocation3 [shape = 'f32[8,128]{1,0:T(8,128)}', space=vmem, size = 0x1000, scoped, tag = 'scratch operand']
  %s0 = inlined_call_operand.hbm [shape: f32[16,128], index: 0, kind: input, shape index: {}]
  %s1 = inlined_call_operand.hbm [shape: f32[1,128], index: 1, kind: output, shape index: {0}]
  %s2 = inlined_call_operand.hbm [shape: f32[1,128], index: 2, kind: output, shape index: {1}]
  %3 = xla_tuple %s1, %s2
  %s4 = sld [smem:[#allocation0]]
  $region34: #{tpu_custom_call.1} parent=0
    _
  %s6 = ssub.s32 1, %s4
  %s7 = scalar_select 0, %s6, %s4
  $region1: #{tpu_custom_call.1} parent=0
    #allocation4 [shape = 'u8[8192]{0}', space=vmem, size = 0x2000, scoped, tag = 'input window, operand 0, single buffered']
    #allocation5 [shape = 's32[1]{0}', space=sflag, size = 0x4, scoped, tag = 'scoped memory for tpu_custom_call.1']
    #allocation6 [shape = 's32[1]{0}', space=sflag, size = 0x4, scoped, tag = 'scoped memory for tpu_custom_call.1']
    #allocation7 [shape = 'u8[512]{0}', space=vmem, size = 0x400, scoped, tag = 'output window, operand 0, single buffered']
    #allocation8 [shape = 'u8[512]{0}', space=vmem, size = 0x400, scoped, tag = 'output window, operand 1, single buffered']
    #allocation9 [shape = 's32[1]{0}', space=sflag, size = 0x4, scoped, tag = 'scoped memory for tpu_custom_call.1']
    %8 = vsyncpa [#allocation5], 0
    %9 = vsyncpa [#allocation6], 0
    %10 = vsyncpa [#allocation9], 0
    // Predicated region
    $region2: #{tpu_custom_call.1} parent=1 // pred_check
      _
    $region3: #{tpu_custom_call.1} parent=1 // pred_check_branch
      %12 = sbr.rel (0) target = $region5
    $region4: #{tpu_custom_call.1} parent=1 // pred_region
      %s14 = ssub.s32 256, 256
      %15 = vsyncadd [#allocation5], %s14
      %s16 = sshll.u32 [#allocation4], 4
      %s17 = int_to_ptr.vmem [resolvable:$true] %s16
      %22 = dma.hbm_to_vmem [thread:$0]  %s0, 256, %s17, [#allocation5], 128, 128, 8
    $region5: #{tpu_custom_call.1} parent=1 // pred_fallthru
      _
    // Predicated region
    $region6: #{tpu_custom_call.1} parent=1 // pred_check
      _
    $region7: #{tpu_custom_call.1} parent=1 // pred_check_branch
      %24 = sbr.rel (0) target = $region9
    $region8: #{tpu_custom_call.1} parent=1 // pred_region
      %25 = dma.done [#allocation5], 256
    $region9: #{tpu_custom_call.1} parent=1 // pred_fallthru
      _
    %p26 = scmp.eq.s32.totalorder 0, 0
    // Predicated region
    $region10: #{tpu_custom_call.1} parent=1 // pred_check
      %p27 = pneg %p26
    $region11: #{tpu_custom_call.1} parent=1 // pred_check_branch
      %29 = sbr.rel (%p27) target = $region13
    $region12: #{tpu_custom_call.1} parent=1 // pred_region
      %30 = vst [vmem:[#allocation2] sm:$0xff] inf
      %31 = vst [vmem:[#allocation3] sm:$0xff] -inf
    $region13: #{tpu_custom_call.1} parent=1 // pred_fallthru
      _
    %v32 = vld [vmem:[#allocation2] sm:$0xff]
    %v33 = vld [vmem:[#allocation3] sm:$0xff]
    %v34 = vld [vmem:[#allocation4] sm:$0xff]
    %v35 = vmin.f32 %v32, %v34
    %v36 = vmax.f32 %v33, %v34
    %s37 = scalar_lea.vmem [#allocation4], 8
    %v38 = vld [vmem:[%s37] sm:$0xff]
    %v39 = vmin.f32 %v35, %v38
    %v40 = vmax.f32 %v36, %v38
    %41 = vst [vmem:[#allocation2] sm:$0xff] %v39
    %42 = vst [vmem:[#allocation3] sm:$0xff] %v40
    // Predicated region
    $region14: #{tpu_custom_call.1} parent=1 // pred_check
      %p43 = pneg %p26
    $region15: #{tpu_custom_call.1} parent=1 // pred_check_branch
      %45 = sbr.rel (%p43) target = $region17
    $region16: #{tpu_custom_call.1} parent=1 // pred_region
      %v46 = vld [vmem:[#allocation2] sm:$0xff]
      %v47 = vrot.slane %v46, 4
      %v48 = vmin.f32 %v46, %v47
      %v49 = vrot.slane %v48, 2
      %v50 = vmin.f32 %v48, %v49
      %v51 = vrot.slane %v50, 1
      %v52 = vmin.f32 %v50, %v51
      %53 = vst [vmem:[#allocation7] sm:$0x1] %v52
      %v54 = vld [vmem:[#allocation3] sm:$0xff]
      %v55 = vrot.slane %v54, 4
      %v56 = vmax.f32 %v54, %v55
      %v57 = vrot.slane %v56, 2
      %v58 = vmax.f32 %v56, %v57
      %v59 = vrot.slane %v58, 1
      %v60 = vmax.f32 %v58, %v59
      %61 = vst [vmem:[#allocation8] sm:$0x1] %v60
    $region17: #{tpu_custom_call.1} parent=1 // pred_fallthru
      _
    // Predicated region
    $region18: #{tpu_custom_call.1} parent=1 // pred_check
      _
    $region19: #{tpu_custom_call.1} parent=1 // pred_check_branch
      %63 = sbr.rel (0) target = $region21
    $region20: #{tpu_custom_call.1} parent=1 // pred_region
      %s65 = ssub.s32 16, 16
      %66 = vsyncadd [#allocation6], %s65
      %s68 = sshll.u32 [#allocation7], 4
      %s69 = int_to_ptr.vmem [resolvable:$true] %s68
      %71 = dma.vmem_to_hbm [thread:$0]  %s69, 16, %s1, [#allocation6]
    $region21: #{tpu_custom_call.1} parent=1 // pred_fallthru
      _
    // Predicated region
    $region22: #{tpu_custom_call.1} parent=1 // pred_check
      _
    $region23: #{tpu_custom_call.1} parent=1 // pred_check_branch
      %73 = sbr.rel (0) target = $region25
    $region24: #{tpu_custom_call.1} parent=1 // pred_region
      %s75 = ssub.s32 16, 16
      %76 = vsyncadd [#allocation9], %s75
      %s78 = sshll.u32 [#allocation8], 4
      %s79 = int_to_ptr.vmem [resolvable:$true] %s78
      %81 = dma.vmem_to_hbm [thread:$0]  %s79, 16, %s2, [#allocation9]
    $region25: #{tpu_custom_call.1} parent=1 // pred_fallthru
      _
    // Predicated region
    $region26: #{tpu_custom_call.1} parent=1 // pred_check
      _
    $region27: #{tpu_custom_call.1} parent=1 // pred_check_branch
      %83 = sbr.rel (0) target = $region29
    $region28: #{tpu_custom_call.1} parent=1 // pred_region
      %84 = dma.done [#allocation6], 16
    $region29: #{tpu_custom_call.1} parent=1 // pred_fallthru
      _
    // Predicated region
    $region30: #{tpu_custom_call.1} parent=1 // pred_check
      _
    $region31: #{tpu_custom_call.1} parent=1 // pred_check_branch
      %86 = sbr.rel (0) target = $region33
    $region32: #{tpu_custom_call.1} parent=1 // pred_region
      %87 = dma.done [#allocation9], 16
    $region33: #{tpu_custom_call.1} parent=1 // pred_fallthru
      _
    %88 = vsyncpa [#allocation5], 1
    %89 = vsyncpa [#allocation6], 1
    %90 = vsyncpa [#allocation9], 1

</llo_original>
